<compile_context>
chip_gen: v5e
topology: v5e:2x2
jax: 0.10.0
libtpu: 0.0.40
codegen_flags: <defaults>
</compile_context>

<pallas_src>
import jax
import jax.numpy as jnp
from jax.experimental import pallas as pl
from jax.experimental.pallas import tpu as pltpu

_LANE = 128
_SUBLANE = 8


def _round_up(x: int, m: int) -> int:
    return ((x + m - 1) // m) * m


def _make_mlp_kernel(num_layers: int, n_output: int, n_out_pad: int, mxu_dtype):
    """Kernel signature: (x_ref, w0, b0, ..., w_{L-1}, b_{L-1}, o_ref)."""

    def kernel(*refs):
        x_ref = refs[0]
        o_ref = refs[-1]
        param_refs = refs[1:-1]

        h = x_ref[...]
        if h.dtype != jnp.float32:
            h = h.astype(jnp.float32)

        for li in range(num_layers):
            w = param_refs[2 * li][...]                       # (in, out), mxu_dtype
            b = param_refs[2 * li + 1][...].astype(jnp.float32)  # (1, out) -> broadcasts
            h = jnp.dot(h.astype(mxu_dtype), w.astype(mxu_dtype),
                        preferred_element_type=jnp.float32) + b
            if li < num_layers - 1:
                h = jnp.maximum(h, 0.0)                       # ReLU (VPU, f32)
            # TODO(synk): Dropout(0.1) is identity in eval mode; training-mode dropout
            # (pltpu.prng_random_bits masking) intentionally not applied here.

        # Mask lane-padding columns so they contribute exp() == 0 to the softmax.
        if n_out_pad != n_output:
            col = jax.lax.broadcasted_iota(jnp.int32, h.shape, dimension=1)
            h = jnp.where(col < n_output, h, jnp.float32(-1e30))

        # Softmax over the last (lane) axis, f32 throughout.
        m = jnp.max(h, axis=-1, keepdims=True)
        e = jnp.exp(h - m)
        denom = jnp.sum(e, axis=-1, keepdims=True)
        o_ref[...] = (e * pl.reciprocal(denom, approx=True)).astype(o_ref.dtype)

    return kernel


def shallow_linear_network(x, params, *, tile_batch: int = 512,
                           mxu_dtype=jnp.bfloat16):
    """params: list of (W, b) with W (in, out), b (1, out). Returns softmax probs."""
    num_layers = len(params)
    batch, n_input = x.shape
    n_output = params[-1][0].shape[1]
    n_out_pad = _round_up(n_output, _LANE)

    # Batch tile: multiple of 8 sublanes, capped (VMEM headroom on 64 MiB v7x parts).
    tb = _round_up(min(tile_batch, _round_up(batch, _SUBLANE)), _SUBLANE)
    batch_pad = _round_up(batch, tb)
    if batch_pad != batch:
        x = jnp.pad(x, ((0, batch_pad - batch), (0, 0)))

    # Flatten params: weights cast once to the MXU dtype, biases kept f32.
    # Pad the final layer's columns to 128-lane multiple for a lane-dense store.
    flat_params = []
    for li, (w, b) in enumerate(params):
        if li == num_layers - 1 and n_out_pad != n_output:
            w = jnp.pad(w, ((0, 0), (0, n_out_pad - n_output)))
            b = jnp.pad(b, ((0, 0), (0, n_out_pad - n_output)))
        flat_params.append(w.astype(mxu_dtype))
        flat_params.append(b.astype(jnp.float32))

    grid = (pl.cdiv(batch_pad, tb),)

    in_specs = [pl.BlockSpec((tb, n_input), lambda i: (i, 0))]
    for p in flat_params:
        # Constant index_map -> weights/biases stay VMEM-resident across grid steps.
        in_specs.append(pl.BlockSpec(p.shape, lambda i: (0, 0)))
    out_specs = pl.BlockSpec((tb, n_out_pad), lambda i: (i, 0))

    flops = 2 * batch_pad * sum(int(w.shape[0]) * int(w.shape[1]) for w, _ in params)
    bytes_accessed = (
        int(x.size) * x.dtype.itemsize
        + sum(int(p.size) * p.dtype.itemsize for p in flat_params)
        + batch_pad * n_out_pad * 4
    )
    cost = pl.CostEstimate(flops=flops,
                           transcendentals=batch_pad * n_out_pad,
                           bytes_accessed=bytes_accessed)

    kernel = _make_mlp_kernel(num_layers, n_output, n_out_pad, mxu_dtype)

    out = pl.pallas_call(
        kernel,
        out_shape=jax.ShapeDtypeStruct((batch_pad, n_out_pad), jnp.float32),
        grid=grid,
        in_specs=in_specs,
        out_specs=out_specs,
        compiler_params=pltpu.CompilerParams(dimension_semantics=("parallel",)),
        cost_estimate=cost,
    )(x, *flat_params)

    return out[:batch, :n_output]


def init_linear_params(key, in_dim, out_dim):
    """Deterministic PyTorch-style uniform init: U(-1/sqrt(in), 1/sqrt(in))."""
    kw, kb = jax.random.split(key)
    bound = 1.0 / jnp.sqrt(jnp.float32(in_dim))
    w = jax.random.uniform(kw, (in_dim, out_dim), jnp.float32, -bound, bound)
    b = jax.random.uniform(kb, (1, out_dim), jnp.float32, -bound, bound)
    return w, b


if __name__ == "__main__":
    # Small shapes consistent with the module: n_input=32, hidden_dims=[64, 32], n_output=16.
    batch = 8
    n_input = 32
    hidden_dims = [64, 32]
    n_output = 16

    key = jax.random.PRNGKey(0)
    key, xk = jax.random.split(key)
    x = jax.random.normal(xk, (batch, n_input), jnp.float32)

    dims = [n_input] + hidden_dims + [n_output]
    params = []
    for i in range(len(dims) - 1):
        key, lk = jax.random.split(key)
        params.append(init_linear_params(lk, dims[i], dims[i + 1]))

    out = shallow_linear_network(x, params)
    out = jax.block_until_ready(out)

    # Reference in plain f32 JAX (same math, same params). Kernel uses bf16 MXU
    # inputs with f32 accumulation + approx reciprocal, so tolerance is loosened.
    h = x
    for i, (w, b) in enumerate(params):
        h = h @ w + b
        if i < len(params) - 1:
            h = jnp.maximum(h, 0.0)
    ref = jax.nn.softmax(h, axis=-1)

    assert out.shape == (batch, n_output)
    assert jnp.allclose(out, ref, atol=2e-2, rtol=1e-2), "mismatch vs JAX reference"
    assert jnp.allclose(jnp.sum(out, axis=-1), 1.0, atol=5e-3), "softmax rows must sum to 1"

    print("KERNEL_OK")
</pallas_src>

<mosaic_0001>
module attributes {stable_mosaic.version = 11 : i64} {
  func.func @kernel(%arg0: i32, %arg1: memref<8x32xf32, #tpu.memory_space<vmem>>, %arg2: memref<32x64xbf16, #tpu.memory_space<vmem>>, %arg3: memref<1x64xf32, #tpu.memory_space<vmem>>, %arg4: memref<64x32xbf16, #tpu.memory_space<vmem>>, %arg5: memref<1x32xf32, #tpu.memory_space<vmem>>, %arg6: memref<32x128xbf16, #tpu.memory_space<vmem>>, %arg7: memref<1x128xf32, #tpu.memory_space<vmem>>, %arg8: memref<8x128xf32, #tpu.memory_space<vmem>>) attributes {dimension_semantics = [#tpu.dimension_semantics<parallel>], iteration_bounds = array<i64: 1>, scalar_prefetch = 0 : i64, scratch_operands = 0 : i64, tpu.core_type = #tpu.core_type<tc>, window_params = [{transform_indices = @transform_0, window_bounds = array<i64: 8, 32>}, {pipeline_mode = #tpu.pipeline_mode<synchronous>, transform_indices = @transform_1, window_bounds = array<i64: 32, 64>}, {pipeline_mode = #tpu.pipeline_mode<synchronous>, transform_indices = @transform_2, window_bounds = array<i64: 1, 64>}, {pipeline_mode = #tpu.pipeline_mode<synchronous>, transform_indices = @transform_3, window_bounds = array<i64: 64, 32>}, {pipeline_mode = #tpu.pipeline_mode<synchronous>, transform_indices = @transform_4, window_bounds = array<i64: 1, 32>}, {pipeline_mode = #tpu.pipeline_mode<synchronous>, transform_indices = @transform_5, window_bounds = array<i64: 32, 128>}, {pipeline_mode = #tpu.pipeline_mode<synchronous>, transform_indices = @transform_6, window_bounds = array<i64: 1, 128>}, {transform_indices = @transform_7, window_bounds = array<i64: 8, 128>}]} {
    %c0 = arith.constant 0 : index
    %c0_0 = arith.constant 0 : index
    %0 = vector.load %arg1[%c0, %c0_0] : memref<8x32xf32, #tpu.memory_space<vmem>>, vector<8x32xf32>
    %c0_1 = arith.constant 0 : index
    %c0_2 = arith.constant 0 : index
    %1 = vector.load %arg2[%c0_1, %c0_2] : memref<32x64xbf16, #tpu.memory_space<vmem>>, vector<32x64xbf16>
    %c0_3 = arith.constant 0 : index
    %c0_4 = arith.constant 0 : index
    %2 = vector.load %arg3[%c0_3, %c0_4] : memref<1x64xf32, #tpu.memory_space<vmem>>, vector<1x64xf32>
    %3 = arith.truncf %0 : vector<8x32xf32> to vector<8x32xbf16>
    %cst = arith.constant dense<0.000000e+00> : vector<8x64xf32>
    %4 = tpu.matmul %3, %1, %cst {dimension_numbers = #tpu.dot_dimension_numbers<[1], [0], [0], [1], [0, 0, 1, 1], [], []>} : vector<8x32xbf16>, vector<32x64xbf16>, vector<8x64xf32> -> vector<8x64xf32>
    %5 = vector.broadcast %2 : vector<1x64xf32> to vector<8x64xf32>
    %6 = arith.addf %4, %5 : vector<8x64xf32>
    %cst_5 = arith.constant 0.000000e+00 : f32
    %7 = vector.broadcast %cst_5 : f32 to vector<8x64xf32>
    %8 = arith.maximumf %6, %7 : vector<8x64xf32>
    %c0_6 = arith.constant 0 : index
    %c0_7 = arith.constant 0 : index
    %9 = vector.load %arg4[%c0_6, %c0_7] : memref<64x32xbf16, #tpu.memory_space<vmem>>, vector<64x32xbf16>
    %c0_8 = arith.constant 0 : index
    %c0_9 = arith.constant 0 : index
    %10 = vector.load %arg5[%c0_8, %c0_9] : memref<1x32xf32, #tpu.memory_space<vmem>>, vector<1x32xf32>
    %11 = arith.truncf %8 : vector<8x64xf32> to vector<8x64xbf16>
    %cst_10 = arith.constant dense<0.000000e+00> : vector<8x32xf32>
    %12 = tpu.matmul %11, %9, %cst_10 {dimension_numbers = #tpu.dot_dimension_numbers<[1], [0], [0], [1], [0, 0, 1, 1], [], []>} : vector<8x64xbf16>, vector<64x32xbf16>, vector<8x32xf32> -> vector<8x32xf32>
    %13 = vector.broadcast %10 : vector<1x32xf32> to vector<8x32xf32>
    %14 = arith.addf %12, %13 : vector<8x32xf32>
    %cst_11 = arith.constant 0.000000e+00 : f32
    %15 = vector.broadcast %cst_11 : f32 to vector<8x32xf32>
    %16 = arith.maximumf %14, %15 : vector<8x32xf32>
    %c0_12 = arith.constant 0 : index
    %c0_13 = arith.constant 0 : index
    %17 = vector.load %arg6[%c0_12, %c0_13] : memref<32x128xbf16, #tpu.memory_space<vmem>>, vector<32x128xbf16>
    %c0_14 = arith.constant 0 : index
    %c0_15 = arith.constant 0 : index
    %18 = vector.load %arg7[%c0_14, %c0_15] : memref<1x128xf32, #tpu.memory_space<vmem>>, vector<1x128xf32>
    %19 = arith.truncf %16 : vector<8x32xf32> to vector<8x32xbf16>
    %cst_16 = arith.constant dense<0.000000e+00> : vector<8x128xf32>
    %20 = tpu.matmul %19, %17, %cst_16 {dimension_numbers = #tpu.dot_dimension_numbers<[1], [0], [0], [1], [0, 0, 1, 1], [], []>} : vector<8x32xbf16>, vector<32x128xbf16>, vector<8x128xf32> -> vector<8x128xf32>
    %21 = vector.broadcast %18 : vector<1x128xf32> to vector<8x128xf32>
    %22 = arith.addf %20, %21 : vector<8x128xf32>
    %23 = tpu.iota {dimensions = array<i32: 1>} : vector<8x128xi32>
    %c16_i32 = arith.constant 16 : i32
    %24 = vector.broadcast %c16_i32 : i32 to vector<8x128xi32>
    %25 = arith.cmpi slt, %23, %24 : vector<8x128xi32>
    %cst_17 = arith.constant -1.000000e+30 : f32
    %26 = vector.broadcast %cst_17 : f32 to vector<8x128xf32>
    %27 = arith.select %25, %22, %26 : vector<8x128xi1>, vector<8x128xf32>
    %cst_18 = arith.constant dense<0xFF800000> : vector<8xf32>
    %28 = vector.multi_reduction <maximumf>, %27, %cst_18 [1] : vector<8x128xf32> to vector<8xf32>
    %29 = vector.shape_cast %28 : vector<8xf32> to vector<8x1xf32>
    %30 = vector.broadcast %29 : vector<8x1xf32> to vector<8x128xf32>
    %31 = arith.subf %27, %30 : vector<8x128xf32>
    %32 = math.exp %31 : vector<8x128xf32>
    %cst_19 = arith.constant dense<0.000000e+00> : vector<8xf32>
    %33 = vector.multi_reduction <add>, %32, %cst_19 [1] : vector<8x128xf32> to vector<8xf32>
    %34 = vector.shape_cast %33 : vector<8xf32> to vector<8x1xf32>
    %35 = tpu.reciprocal %34 {approx = true} : vector<8x1xf32> -> vector<8x1xf32>
    %36 = vector.broadcast %35 : vector<8x1xf32> to vector<8x128xf32>
    %37 = arith.mulf %32, %36 : vector<8x128xf32>
    %c0_20 = arith.constant 0 : index
    %c0_21 = arith.constant 0 : index
    %38 = vector.load %arg8[%c0_20, %c0_21] : memref<8x128xf32, #tpu.memory_space<vmem>>, vector<8x128xf32>
    tpu.vector_store %arg8[%c0_20, %c0_21], %37 {strides = array<i32>} : memref<8x128xf32, #tpu.memory_space<vmem>>, vector<8x128xf32>,
    return
  }
  func.func @transform_0(%arg0: i32) -> (i32, i32) {
    %c0_i32 = arith.constant 0 : i32
    %c0_i32_0 = arith.constant 0 : i32
    return %arg0, %c0_i32 : i32, i32
  }
  func.func @transform_1(%arg0: i32) -> (i32, i32) {
    %c0_i32 = arith.constant 0 : i32
    %c0_i32_0 = arith.constant 0 : i32
    %c0_i32_1 = arith.constant 0 : i32
    return %c0_i32, %c0_i32_0 : i32, i32
  }
  func.func @transform_2(%arg0: i32) -> (i32, i32) {
    %c0_i32 = arith.constant 0 : i32
    %c0_i32_0 = arith.constant 0 : i32
    %c0_i32_1 = arith.constant 0 : i32
    return %c0_i32, %c0_i32_0 : i32, i32
  }
  func.func @transform_3(%arg0: i32) -> (i32, i32) {
    %c0_i32 = arith.constant 0 : i32
    %c0_i32_0 = arith.constant 0 : i32
    %c0_i32_1 = arith.constant 0 : i32
    return %c0_i32, %c0_i32_0 : i32, i32
  }
  func.func @transform_4(%arg0: i32) -> (i32, i32) {
    %c0_i32 = arith.constant 0 : i32
    %c0_i32_0 = arith.constant 0 : i32
    %c0_i32_1 = arith.constant 0 : i32
    return %c0_i32, %c0_i32_0 : i32, i32
  }
  func.func @transform_5(%arg0: i32) -> (i32, i32) {
    %c0_i32 = arith.constant 0 : i32
    %c0_i32_0 = arith.constant 0 : i32
    %c0_i32_1 = arith.constant 0 : i32
    return %c0_i32, %c0_i32_0 : i32, i32
  }
  func.func @transform_6(%arg0: i32) -> (i32, i32) {
    %c0_i32 = arith.constant 0 : i32
    %c0_i32_0 = arith.constant 0 : i32
    %c0_i32_1 = arith.constant 0 : i32
    return %c0_i32, %c0_i32_0 : i32, i32
  }
  func.func @transform_7(%arg0: i32) -> (i32, i32) {
    %c0_i32 = arith.constant 0 : i32
    %c0_i32_0 = arith.constant 0 : i32
    return %arg0, %c0_i32 : i32, i32
  }
}

</mosaic_0001>

<llo_original>
// kernel: tpu_custom_call.1
$region0: #{tpu_custom_call.1}
  #allocation0 [shape = 'u32[]', space=smem, size = 0x4, offset = 0x4, fixed_abs, tag = 'smem constant byte address 0x4 - core index']
  #allocation1 [shape = 'u32[72,128]{1,0:T(1,128)}', space=vmem, size = 0x9000, scoped, tag = 'internal scratch']
  %s0 = inlined_call_operand.vmem [shape: f32[8,32], index: 0, kind: input, shape index: {}]
  %s1 = inlined_call_operand.vmem [shape: bf16[32,64], index: 1, kind: input, shape index: {}]
  %s2 = inlined_call_operand.vmem [shape: f32[1,64], index: 2, kind: input, shape index: {}]
  %s3 = inlined_call_operand.vmem [shape: bf16[64,32], index: 3, kind: input, shape index: {}]
  %s4 = inlined_call_operand.vmem [shape: f32[1,32], index: 4, kind: input, shape index: {}]
  %s5 = inlined_call_operand.vmem [shape: bf16[32,128], index: 5, kind: input, shape index: {}]
  %s6 = inlined_call_operand.vmem [shape: f32[1,128], index: 6, kind: input, shape index: {}]
  %s7 = inlined_call_operand.hbm [shape: f32[8,128], index: 7, kind: output, shape index: {}]
  %s8 = sld [smem:[#allocation0]]
  $region38: #{tpu_custom_call.1} parent=0
    _
  %s10 = ssub.s32 1, %s8
  %s11 = scalar_select 0, %s10, %s8
  $region1: #{tpu_custom_call.1} parent=0
    #allocation2 [shape = 'u8[4096]{0}', space=vmem, size = 0x1000, scoped, tag = 'output window, operand 0, single buffered']
    #allocation3 [shape = 's32[1]{0}', space=sflag, size = 0x4, scoped, tag = 'scoped memory for tpu_custom_call.1']
    %12 = vsyncpa [#allocation3], 0
    // Predicated region
    $region2: #{tpu_custom_call.1} parent=1 // pred_check
      _
    $region3: #{tpu_custom_call.1} parent=1 // pred_check_branch
      %14 = sbr.rel (0) target = $region5
    $region4: #{tpu_custom_call.1} parent=1 // pred_region
      _
    $region5: #{tpu_custom_call.1} parent=1 // pred_fallthru
      _
    // Predicated region
    $region6: #{tpu_custom_call.1} parent=1 // pred_check
      _
    $region7: #{tpu_custom_call.1} parent=1 // pred_check_branch
      %16 = sbr.rel (0) target = $region9
    $region8: #{tpu_custom_call.1} parent=1 // pred_region
      _
    $region9: #{tpu_custom_call.1} parent=1 // pred_fallthru
      _
    // Predicated region
    $region10: #{tpu_custom_call.1} parent=1 // pred_check
      _
    $region11: #{tpu_custom_call.1} parent=1 // pred_check_branch
      %18 = sbr.rel (0) target = $region13
    $region12: #{tpu_custom_call.1} parent=1 // pred_region
      _
    $region13: #{tpu_custom_call.1} parent=1 // pred_fallthru
      _
    // Predicated region
    $region14: #{tpu_custom_call.1} parent=1 // pred_check
      _
    $region15: #{tpu_custom_call.1} parent=1 // pred_check_branch
      %20 = sbr.rel (0) target = $region17
    $region16: #{tpu_custom_call.1} parent=1 // pred_region
      _
    $region17: #{tpu_custom_call.1} parent=1 // pred_fallthru
      _
    // Predicated region
    $region18: #{tpu_custom_call.1} parent=1 // pred_check
      _
    $region19: #{tpu_custom_call.1} parent=1 // pred_check_branch
      %22 = sbr.rel (0) target = $region21
    $region20: #{tpu_custom_call.1} parent=1 // pred_region
      _
    $region21: #{tpu_custom_call.1} parent=1 // pred_fallthru
      _
    // Predicated region
    $region22: #{tpu_custom_call.1} parent=1 // pred_check
      _
    $region23: #{tpu_custom_call.1} parent=1 // pred_check_branch
      %24 = sbr.rel (0) target = $region25
    $region24: #{tpu_custom_call.1} parent=1 // pred_region
      _
    $region25: #{tpu_custom_call.1} parent=1 // pred_fallthru
      _
    // Predicated region
    $region26: #{tpu_custom_call.1} parent=1 // pred_check
      _
    $region27: #{tpu_custom_call.1} parent=1 // pred_check_branch
      %26 = sbr.rel (0) target = $region29
    $region28: #{tpu_custom_call.1} parent=1 // pred_region
      _
    $region29: #{tpu_custom_call.1} parent=1 // pred_fallthru
      _
    %v28 = vld [vmem:[%s0] sm:$0xff]
    %v29 = vld [vmem:[%s1] sm:$0xf]
    %v30 = vld [vmem:[%s1 + $0x4] sm:$0xf]
    %v31 = vld [vmem:[%s1 + $0x8] sm:$0xf]
    %v32 = vld [vmem:[%s1 + $0xc] sm:$0xf]
    %v33 = vld [vmem:[%s2] sm:$0x1]
    %v34 = vpack.c.bf16 %v28, %v28
    %v36 = vperm.slane %v33, 0
    %v42 = vunpack.c.l.b16 %v29
    %v43 = vunpack.c.l.b16 %v30
    %v44 = vunpack.c.l.b16 %v31
    %v45 = vunpack.c.l.b16 %v32
    %v46 = vpack.c.b16 %v43, %v42
    %v47 = vpack.c.b16 %v45, %v44
    %vm50 = vcmask 261120
    %v52 = vsel %vm50, %v34, 0
    %54 = vmatpush.bf16.msra.mxu0 0
    %55 = vmatpush.bf16.msra.mxu0 0
    %56 = vmatpush.bf16.msra.mxu0 0
    %57 = vmatpush.bf16.msra.mxu0 0
    %58 = vmatpush.bf16.msra.mxu0 0
    %59 = vmatpush.bf16.msra.mxu0 0
    %60 = vmatpush.bf16.msra.mxu0 %v47
    %61 = vmatpush.bf16.msra.mxu0 %v46
    %62 = vmatmul.bf16.gmra.mxu0 %v52
    %v63 = vpop.f32.mrf.mxu0
    %v64 = vadd.f32 %v36, %v63
    %v65 = vpop.f32.mrf.mxu0
    %66 = vdwg.mxu0
    %v67 = vmax.f32 %v64, 0.0
    %v68 = vld [vmem:[%s3] sm:$0xf]
    %v69 = vld [vmem:[%s3 + $0x4] sm:$0xf]
    %v70 = vld [vmem:[%s3 + $0x8] sm:$0xf]
    %v71 = vld [vmem:[%s3 + $0xc] sm:$0xf]
    %v72 = vld [vmem:[%s3 + $0x10] sm:$0xf]
    %v73 = vld [vmem:[%s3 + $0x14] sm:$0xf]
    %v74 = vld [vmem:[%s3 + $0x18] sm:$0xf]
    %v75 = vld [vmem:[%s3 + $0x1c] sm:$0xf]
    %v76 = vld [vmem:[%s4] sm:$0x1]
    %v77 = vpack.c.bf16 %v67, %v67
    %v79 = vperm.slane %v76, 0
    %v89 = vunpack.c.l.b16 %v68
    %v90 = vunpack.c.l.b16 %v69
    %v91 = vunpack.c.l.b16 %v70
    %v92 = vunpack.c.l.b16 %v71
    %v93 = vunpack.c.l.b16 %v72
    %v94 = vunpack.c.l.b16 %v73
    %v95 = vunpack.c.l.b16 %v74
    %v96 = vunpack.c.l.b16 %v75
    %v97 = vpack.c.b16 %v90, %v89
    %v98 = vpack.c.b16 %v92, %v91
    %v99 = vpack.c.b16 %v94, %v93
    %v100 = vpack.c.b16 %v96, %v95
    %vm105 = vcmask 523264
    %v107 = vsel %vm105, %v77, 0
    %109 = vmatpush.bf16.msra.mxu0 0
    %110 = vmatpush.bf16.msra.mxu0 0
    %111 = vmatpush.bf16.msra.mxu0 0
    %112 = vmatpush.bf16.msra.mxu0 0
    %113 = vmatpush.bf16.msra.mxu0 %v100
    %114 = vmatpush.bf16.msra.mxu0 %v99
    %115 = vmatpush.bf16.msra.mxu0 %v98
    %116 = vmatpush.bf16.msra.mxu0 %v97
    %117 = vmatmul.bf16.gmra.mxu0 %v107
    %v118 = vpop.f32.mrf.mxu0
    %v119 = vadd.f32 %v79, %v118
    %v120 = vpop.f32.mrf.mxu0
    %121 = vdwg.mxu0
    %v122 = vmax.f32 %v119, 0.0
    %v123 = vld [vmem:[%s5] sm:$0xf]
    %v124 = vld [vmem:[%s5 + $0x4] sm:$0xf]
    %v125 = vld [vmem:[%s5 + $0x8] sm:$0xf]
    %v126 = vld [vmem:[%s5 + $0xc] sm:$0xf]
    %v127 = vld [vmem:[%s6] sm:$0x1]
    %v128 = vpack.c.bf16 %v122, %v122
    %v130 = vperm.slane %v127, 0
    %v136 = vunpack.c.l.b16 %v123
    %v137 = vunpack.c.l.b16 %v124
    %v138 = vunpack.c.l.b16 %v125
    %v139 = vunpack.c.l.b16 %v126
    %v140 = vpack.c.b16 %v137, %v136
    %v141 = vpack.c.b16 %v139, %v138
    %v145 = vsel %vm50, %v128, 0
    %147 = vmatpush.bf16.msra.mxu0 0
    %148 = vmatpush.bf16.msra.mxu0 0
    %149 = vmatpush.bf16.msra.mxu0 0
    %150 = vmatpush.bf16.msra.mxu0 0
    %151 = vmatpush.bf16.msra.mxu0 0
    %152 = vmatpush.bf16.msra.mxu0 0
    %153 = vmatpush.bf16.msra.mxu0 %v141
    %154 = vmatpush.bf16.msra.mxu0 %v140
    %155 = vmatmul.bf16.gmra.mxu0 %v145
    %v156 = vpop.f32.mrf.mxu0
    %v157 = vadd.f32 %v130, %v156
    %v158 = vpop.f32.mrf.mxu0
    %159 = vdwg.mxu0
    %v160 = vlaneseq
    %v161 = vand.u32 %v160, 127
    %vm162 = vcmp.lt.s32.totalorder %v161, 16
    %v163 = vsel %vm162, %v157, -1e+30
    %164 = vmax.xlane.f32.xlu0 %v163
    %v165 = vpop.xlane.xlu0 %164
    %v166 = vsub.f32 %v163, %v165
    %v167 = vmul.f32 %v166, 1.442695
    %v168 = vpow.pop %v167
    %169 = vadd.xlane.f32.xlu0 %v168
    %v170 = vpop.xlane.xlu0 %169
    %v171 = vrcp.pop %v170
    %v172 = vmul.f32 %v168, %v171
    %173 = vst [vmem:[#allocation2] sm:$0xff] %v172
    // Predicated region
    $region30: #{tpu_custom_call.1} parent=1 // pred_check
      _
    $region31: #{tpu_custom_call.1} parent=1 // pred_check_branch
      %175 = sbr.rel (0) target = $region33
    $region32: #{tpu_custom_call.1} parent=1 // pred_region
      %177 = vsyncadd [#allocation3], 0
      %s179 = sshll.u32 [#allocation2], 4
      %s180 = int_to_ptr.vmem [resolvable:$true] %s179
      %s181 = sshll.u32 %s7, 4
      %s182 = int_to_ptr.hbm [resolvable:$true] %s181
      %184 = dma.vmem_to_hbm [thread:$0]  %s180, 128, %s182, [#allocation3]
    $region33: #{tpu_custom_call.1} parent=1 // pred_fallthru
      _
    // Predicated region
    $region34: #{tpu_custom_call.1} parent=1 // pred_check
      _
    $region35: #{tpu_custom_call.1} parent=1 // pred_check_branch
      %186 = sbr.rel (0) target = $region37
    $region36: #{tpu_custom_call.1} parent=1 // pred_region
      %188 = dma.done [#allocation3], 128
    $region37: #{tpu_custom_call.1} parent=1 // pred_fallthru
      _
    %189 = vsyncpa [#allocation3], 1

</llo_original>
